<compile_context>
chip_gen: v7x
topology: tpu7x:2x2x1
jax: 0.10.0
libtpu: 0.0.40
codegen_flags: <defaults>
</compile_context>

<pallas_src>
import functools

import jax
import jax.numpy as jnp
from jax.experimental import pallas as pl
from jax.experimental.pallas import tpu as pltpu


# ---------------------------------------------------------------------------
# Kernel
# ---------------------------------------------------------------------------
def _tv_kernel(x_ref, out_ref, z_acc, y_acc, w_acc, carry_ref, *,
               td, h, w, d_total):
    """Accumulates per-(batch, channel) TV partial sums over depth tiles.

    x_ref:      (td, h, w) tile of the input volume (source dtype).
    out_ref:    (1, 3) f32 -> [z_sum, y_sum, x_sum], written at the last D tile.
    z_acc:      (h, w)           f32 scratch accumulator (depth diffs).
    y_acc:      (max(h-1,1), w)  f32 scratch accumulator (height diffs).
    w_acc:      (h, max(w-1,1))  f32 scratch accumulator (width diffs).
    carry_ref:  (h, w) f32 scratch holding the previous tile's last depth slice.
    """
    dt = pl.program_id(2)
    nd = pl.num_programs(2)

    @pl.when(dt == 0)
    def _init():
        z_acc[...] = jnp.zeros_like(z_acc)
        y_acc[...] = jnp.zeros_like(y_acc)
        w_acc[...] = jnp.zeros_like(w_acc)

    # Hoisted upcast: a single f32 pass over the tile, reused by every diff.
    xf = x_ref[...].astype(jnp.float32)                      # (td, h, w)

    # Ragged last tile (cdiv tiling): mask out-of-range depth rows.  Static
    # flag, so fully-divisible shapes pay nothing for this.
    ragged = (d_total % td) != 0
    if ragged:
        valid = jnp.minimum(d_total - dt * td, td)           # scalar, >= 1
        didx = jax.lax.broadcasted_iota(jnp.int32, (td, 1, 1), 0)
        row_ok = didx < valid                                # (td, 1, 1) bool

    # ---- depth diffs: tile boundary (uses f32 carry from the previous tile) --
    @pl.when(dt > 0)
    def _boundary():
        z_acc[...] += jnp.abs(xf[0] - carry_ref[...])

    # New carry = last depth slice of this tile (read-before-write above).
    # On the ragged last tile this row may be padding, but it is never read.
    carry_ref[...] = xf[td - 1]

    # ---- depth diffs: within tile (leading-axis slice, no lane/sublane retile)
    if td > 1:
        zd = jnp.abs(xf[1:] - xf[:-1])                       # (td-1, h, w)
        if ragged:
            zd = jnp.where(row_ok[1:], zd, 0.0)              # pair valid iff i+1 < valid
        z_acc[...] += jnp.sum(zd, axis=0)

    # ---- height (sublane axis) diffs ----
    if h > 1:
        yd = jnp.abs(xf[:, 1:, :] - xf[:, :-1, :])           # (td, h-1, w)
        if ragged:
            yd = jnp.where(row_ok, yd, 0.0)
        y_acc[...] += jnp.sum(yd, axis=0)

    # ---- width (lane axis) diffs ----
    if w > 1:
        wd = jnp.abs(xf[:, :, 1:] - xf[:, :, :-1])           # (td, h, w-1)
        if ragged:
            wd = jnp.where(row_ok, wd, 0.0)
        w_acc[...] += jnp.sum(wd, axis=0)

    # ---- finalize: one cross-lane/sublane reduction per (b, c) ----
    @pl.when(dt == nd - 1)
    def _finalize():
        zs = jnp.sum(z_acc[...])
        ys = jnp.sum(y_acc[...])
        ws = jnp.sum(w_acc[...])
        col = jax.lax.broadcasted_iota(jnp.int32, (1, 3), 1)
        out_ref[...] = jnp.where(col == 0, zs, jnp.where(col == 1, ys, ws))


# ---------------------------------------------------------------------------
# VMEM budgeting (generation-aware)
# ---------------------------------------------------------------------------
def _vmem_capacity_bytes():
    """Per-core VMEM capacity; conservative fallback (v7x = 64 MiB/TC)."""
    try:
        cap = int(pltpu.get_tpu_info().vmem_capacity_bytes)
        if cap > 0:
            return cap
    except Exception:
        pass
    return 64 * 1024 * 1024


def _pick_d_tile(d, h, w, itemsize, vmem_cap, d_block=None):
    """Largest depth-tile (cdiv tiling) that fits the VMEM budget.

    Budget per depth slice: 2x source-dtype input (double buffering) plus ~4x
    f32 working set (hoisted upcast + diff temporaries).  Fixed scratch: three
    f32 accumulators + f32 carry plane.
    """
    plane_in = max(1, h * w * itemsize)
    plane_f32 = h * w * 4
    fixed = 4 * plane_f32
    per_slice = 2 * plane_in + 4 * plane_f32
    budget = int(vmem_cap * 0.70) - fixed
    cap = max(1, budget // per_slice)
    cap = int(min(cap, d))
    if d_block is not None:
        cap = max(1, min(cap, int(d_block)))
    return cap


def _vmem_limit_bytes(vmem_cap, td, h, w, itemsize):
    plane_in = max(1, h * w * itemsize)
    plane_f32 = h * w * 4
    need = 4 * plane_f32 + td * (2 * plane_in + 4 * plane_f32) + (4 << 20)
    limit = max(32 << 20, need)
    limit = min(limit, int(vmem_cap * 0.95))
    return int(max(limit, 1 << 20))


# ---------------------------------------------------------------------------
# Wrapper
# ---------------------------------------------------------------------------
def _tv_partial_sums(x5, d_block=None, buffer_count=None):
    """Per-batch TV partial sums. x5: (B, C, D, H, W) -> three (B,) f32 arrays."""
    B, C, D, H, W = x5.shape

    # (perf) lane-dense layout for narrow-W volumes: put the long spatial axis
    # on the lane (last) dim; swap the y/x partial-sum labels afterwards.
    swapped = (W < 128) and (H >= 128)
    if swapped:
        x5 = jnp.swapaxes(x5, -1, -2)

    # (perf, v7x) guarantee >= 2 independent "parallel" grid units when
    # B*C == 1: treat the two depth halves as channels and add back the single
    # missing cross-half depth diff (one tiny plane reduction, outside the
    # kernel).  Harmless on single-TensorCore chips.
    z_boundary = None
    if B * C == 1 and D % 2 == 0 and D >= 4:
        half = D // 2
        lo = x5[:, :, half - 1].astype(jnp.float32)
        hi = x5[:, :, half].astype(jnp.float32)
        z_boundary = jnp.sum(jnp.abs(hi - lo), axis=(1, 2, 3))      # (B,)
        Bk, Ck, Dk = B, 2 * C, half
        x5 = x5.reshape(Bk, Ck, Dk, x5.shape[3], x5.shape[4])
    else:
        Bk, Ck, Dk = B, C, D

    Hk, Wk = int(x5.shape[3]), int(x5.shape[4])
    itemsize = jnp.dtype(x5.dtype).itemsize

    vmem_cap = _vmem_capacity_bytes()
    td = _pick_d_tile(Dk, Hk, Wk, itemsize, vmem_cap, d_block)
    n_d_tiles = pl.cdiv(Dk, td)
    vmem_limit = _vmem_limit_bytes(vmem_cap, td, Hk, Wk, itemsize)

    kernel = functools.partial(_tv_kernel, td=td, h=Hk, w=Wk, d_total=Dk)

    in_spec_kwargs = {}
    if buffer_count is not None:
        # Optional deeper pipelining knob (sweep 2..3 if a DMA bubble remains).
        in_spec_kwargs["pipeline_mode"] = pl.Buffered(int(buffer_count))
    in_spec = pl.BlockSpec((None, None, td, Hk, Wk),
                           lambda b, c, d: (b, c, d, 0, 0),
                           **in_spec_kwargs)

    out = pl.pallas_call(
        kernel,
        out_shape=jax.ShapeDtypeStruct((Bk, Ck, 1, 3), jnp.float32),
        grid=(Bk, Ck, n_d_tiles),
        in_specs=[in_spec],
        out_specs=pl.BlockSpec((None, None, 1, 3), lambda b, c, d: (b, c, 0, 0)),
        scratch_shapes=[
            pltpu.VMEM((Hk, Wk), jnp.float32),                 # z (depth) acc
            pltpu.VMEM((max(Hk - 1, 1), Wk), jnp.float32),     # y (height) acc
            pltpu.VMEM((Hk, max(Wk - 1, 1)), jnp.float32),     # x (width) acc
            pltpu.VMEM((Hk, Wk), jnp.float32),                 # f32 depth-halo carry
        ],
        compiler_params=pltpu.CompilerParams(
            dimension_semantics=("parallel", "parallel", "arbitrary"),
            vmem_limit_bytes=vmem_limit),
        cost_estimate=pl.CostEstimate(
            flops=6 * Bk * Ck * Dk * Hk * Wk,   # sub + abs along each of 3 axes
            transcendentals=0,
            bytes_accessed=Bk * Ck * Dk * Hk * Wk * itemsize + Bk * Ck * 3 * 4),
    )(x5)

    sums = out[:, :, 0, :].sum(axis=1)          # reduce (real + fake) channels -> (B, 3)
    z_sum, y_sum, x_sum = sums[:, 0], sums[:, 1], sums[:, 2]
    if z_boundary is not None:
        z_sum = z_sum + z_boundary
    if swapped:
        y_sum, x_sum = x_sum, y_sum
    return z_sum, y_sum, x_sum


@functools.partial(jax.jit,
                   static_argnames=("is_mean_reduction", "d_block", "buffer_count"))
def total_variation_l1(tensor_, *, is_mean_reduction=False, d_block=None,
                       buffer_count=None):
    """JAX/Pallas port of TotalVariationL1.forward.

    Accepts 3D (D,H,W), 4D (C,D,H,W) or 5D (B,C,D,H,W) inputs.
    3D/4D -> scalar output; 5D -> per-batch array of shape (B,).
    """
    ndims = tensor_.ndim
    if ndims == 3:
        x5 = tensor_[None, None]
    elif ndims == 4:
        x5 = tensor_[None]
    elif ndims == 5:
        x5 = tensor_
    else:
        raise ValueError("Input tensor must be either 3, 4 or 5-dimensional.")

    B, C, D, H, W = x5.shape
    z_sum, y_sum, x_sum = _tv_partial_sums(x5, d_block=d_block,
                                           buffer_count=buffer_count)   # (B,) each

    if is_mean_reduction:
        # Mirrors `diff.shape[sum_axis[0]:].numel()` from the PyTorch code.
        # (Degenerate extents, e.g. D == 1, divide by zero exactly like the
        # PyTorch reference.)
        z_den = float(C * (D - 1) * H * W)
        y_den = float(C * D * (H - 1) * W)
        x_den = float(C * D * H * (W - 1))
    else:
        z_den = y_den = x_den = 1.0

    result = z_sum / z_den + y_sum / y_den + x_sum / x_den
    result = result.astype(tensor_.dtype)
    if ndims == 5:
        return result        # shape (B,)
    return result[0]         # scalar


# ---------------------------------------------------------------------------
# Pure-JAX reference (validation only)
# ---------------------------------------------------------------------------
def _reference_tv(x, *, is_mean_reduction=False):
    ndims = x.ndim
    if ndims == 3:
        z = x[1:] - x[:-1]
        y = x[:, 1:] - x[:, :-1]
        w = x[:, :, 1:] - x[:, :, :-1]
        axes = (0, 1, 2)
    elif ndims == 4:
        z = x[:, 1:] - x[:, :-1]
        y = x[:, :, 1:] - x[:, :, :-1]
        w = x[:, :, :, 1:] - x[:, :, :, :-1]
        axes = (0, 1, 2, 3)
    else:
        z = x[:, :, 1:] - x[:, :, :-1]
        y = x[:, :, :, 1:] - x[:, :, :, :-1]
        w = x[:, :, :, :, 1:] - x[:, :, :, :, :-1]
        axes = (1, 2, 3, 4)
    start = axes[0]

    def numel_from(a):
        n = 1
        for s in a.shape[start:]:
            n *= s
        return n

    zd = numel_from(z) if is_mean_reduction else 1
    yd = numel_from(y) if is_mean_reduction else 1
    wd = numel_from(w) if is_mean_reduction else 1
    return (jnp.sum(jnp.abs(z), axis=axes) / zd
            + jnp.sum(jnp.abs(y), axis=axes) / yd
            + jnp.sum(jnp.abs(w), axis=axes) / wd)


if __name__ == "__main__":
    key = jax.random.PRNGKey(0)
    k1, k2, k3, k4 = jax.random.split(key, 4)

    # Small unaligned volume (W=16 < 128).
    x_a = jax.random.normal(k1, (2, 4, 8, 16, 16), dtype=jnp.float32)
    # (8, 128)-aligned volume.
    x_b = jax.random.normal(k2, (1, 2, 6, 8, 128), dtype=jnp.float32)
    # Narrow-W / tall-H volume -> exercises the lane-dense transpose path.
    x_c = jax.random.normal(k3, (1, 2, 4, 128, 16), dtype=jnp.float32)
    # bf16 input, B*C == 1 -> source-dtype DMA + depth-halves parallel split.
    x_d = jax.random.normal(k4, (1, 1, 8, 16, 16),
                            dtype=jnp.float32).astype(jnp.bfloat16)

    # (input, forced depth-tile): small d_block forces multi-tile / ragged depth
    # so the halo carry and the ragged-tile masking paths are exercised.
    cases = [
        (x_a, None), (x_a, 3),    # 8 = 3 + 3 + 2 (ragged last tile)
        (x_b, None), (x_b, 4),    # 6 = 4 + 2     (ragged last tile, aligned HW)
        (x_c, None),
    ]
    for xin, db in cases:
        for mean in (False, True):
            got = jax.block_until_ready(
                total_variation_l1(xin, is_mean_reduction=mean, d_block=db))
            ref = _reference_tv(xin, is_mean_reduction=mean)
            assert jnp.allclose(got, ref, rtol=1e-4, atol=1e-4), \
                (xin.shape, db, mean, got, ref)

    # bf16 input (compare in f32; result itself is cast back to bf16).
    got = jax.block_until_ready(total_variation_l1(x_d))
    ref = _reference_tv(x_d.astype(jnp.float32))
    assert jnp.allclose(got.astype(jnp.float32), ref, rtol=2e-2, atol=0.5), (got, ref)

    # 3-D and 4-D promotion paths (scalar outputs); the 3-D case has B*C == 1
    # so it also exercises the depth-halves parallel split.
    x3 = x_a[0, 0]
    x4 = x_a[0]
    assert jnp.allclose(total_variation_l1(x3), _reference_tv(x3),
                        rtol=1e-4, atol=1e-4)
    assert jnp.allclose(total_variation_l1(x4), _reference_tv(x4),
                        rtol=1e-4, atol=1e-4)

    print("KERNEL_OK")
</pallas_src>

<mosaic_0001>
module attributes {stable_mosaic.version = 11 : i64} {
  func.func @_tv_kernel(%arg0: i32, %arg1: i32, %arg2: i32, %arg3: memref<1x1x8x16x16xf32, #tpu.memory_space<vmem>>, %arg4: memref<1x1x1x3xf32, #tpu.memory_space<vmem>>, %arg5: memref<16x16xf32, #tpu.memory_space<vmem>>, %arg6: memref<15x16xf32, #tpu.memory_space<vmem>>, %arg7: memref<16x15xf32, #tpu.memory_space<vmem>>, %arg8: memref<16x16xf32, #tpu.memory_space<vmem>>) attributes {dimension_semantics = [#tpu.dimension_semantics<parallel>, #tpu.dimension_semantics<parallel>, #tpu.dimension_semantics<arbitrary>], iteration_bounds = array<i64: 2, 4, 1>, scalar_prefetch = 0 : i64, scratch_operands = 4 : i64, tpu.core_type = #tpu.core_type<tc>, window_params = [{transform_indices = @transform_0, window_bounds = array<i64: 1, 1, 8, 16, 16>}, {transform_indices = @transform_1, window_bounds = array<i64: 1, 1, 1, 3>}]} {
    %c0_i32 = arith.constant 0 : i32
    %0 = arith.cmpi eq, %arg2, %c0_i32 : i32
    %1 = arith.extui %0 : i1 to i32
    %c0_i32_0 = arith.constant 0 : i32
    %2 = arith.cmpi ne, %1, %c0_i32_0 : i32
    scf.if %2 {
      %cst_25 = arith.constant 0.000000e+00 : f32
      %38 = vector.broadcast %cst_25 : f32 to vector<16x16xf32>
      %c0_26 = arith.constant 0 : index
      %c0_27 = arith.constant 0 : index
      %39 = vector.load %arg5[%c0_26, %c0_27] : memref<16x16xf32, #tpu.memory_space<vmem>>, vector<16x16xf32>
      tpu.vector_store %arg5[%c0_26, %c0_27], %38 {strides = array<i32>} : memref<16x16xf32, #tpu.memory_space<vmem>>, vector<16x16xf32>,
      %cst_28 = arith.constant 0.000000e+00 : f32
      %40 = vector.broadcast %cst_28 : f32 to vector<15x16xf32>
      %c0_29 = arith.constant 0 : index
      %c0_30 = arith.constant 0 : index
      %41 = vector.load %arg6[%c0_29, %c0_30] : memref<15x16xf32, #tpu.memory_space<vmem>>, vector<15x16xf32>
      tpu.vector_store %arg6[%c0_29, %c0_30], %40 {strides = array<i32>} : memref<15x16xf32, #tpu.memory_space<vmem>>, vector<15x16xf32>,
      %cst_31 = arith.constant 0.000000e+00 : f32
      %42 = vector.broadcast %cst_31 : f32 to vector<16x15xf32>
      %c0_32 = arith.constant 0 : index
      %c0_33 = arith.constant 0 : index
      %43 = vector.load %arg7[%c0_32, %c0_33] : memref<16x15xf32, #tpu.memory_space<vmem>>, vector<16x15xf32>
      tpu.vector_store %arg7[%c0_32, %c0_33], %42 {strides = array<i32>} : memref<16x15xf32, #tpu.memory_space<vmem>>, vector<16x15xf32>,
    } else {
    }
    %c0 = arith.constant 0 : index
    %c0_1 = arith.constant 0 : index
    %c0_2 = arith.constant 0 : index
    %c0_3 = arith.constant 0 : index
    %c0_4 = arith.constant 0 : index
    %3 = vector.load %arg3[%c0, %c0_1, %c0_2, %c0_3, %c0_4] : memref<1x1x8x16x16xf32, #tpu.memory_space<vmem>>, vector<1x1x8x16x16xf32>
    %4 = vector.shape_cast %3 : vector<1x1x8x16x16xf32> to vector<8x16x16xf32>
    %c0_i32_5 = arith.constant 0 : i32
    %5 = arith.cmpi sgt, %arg2, %c0_i32_5 : i32
    %6 = arith.extui %5 : i1 to i32
    %c0_i32_6 = arith.constant 0 : i32
    %7 = arith.cmpi ne, %6, %c0_i32_6 : i32
    scf.if %7 {
      %c0_25 = arith.constant 0 : index
      %c0_26 = arith.constant 0 : index
      %38 = vector.load %arg5[%c0_25, %c0_26] : memref<16x16xf32, #tpu.memory_space<vmem>>, vector<16x16xf32>
      %39 = vector.extract_strided_slice %4 {offsets = [0, 0, 0], sizes = [1, 16, 16], strides = [1, 1, 1]} : vector<8x16x16xf32> to vector<1x16x16xf32>
      %40 = vector.shape_cast %39 : vector<1x16x16xf32> to vector<16x16xf32>
      %c0_27 = arith.constant 0 : index
      %c0_28 = arith.constant 0 : index
      %41 = vector.load %arg8[%c0_27, %c0_28] : memref<16x16xf32, #tpu.memory_space<vmem>>, vector<16x16xf32>
      %42 = arith.subf %40, %41 : vector<16x16xf32>
      %43 = math.absf %42 : vector<16x16xf32>
      %44 = arith.addf %38, %43 : vector<16x16xf32>
      %c0_29 = arith.constant 0 : index
      %c0_30 = arith.constant 0 : index
      %45 = vector.load %arg5[%c0_29, %c0_30] : memref<16x16xf32, #tpu.memory_space<vmem>>, vector<16x16xf32>
      tpu.vector_store %arg5[%c0_29, %c0_30], %44 {strides = array<i32>} : memref<16x16xf32, #tpu.memory_space<vmem>>, vector<16x16xf32>,
    } else {
    }
    %8 = vector.extract_strided_slice %4 {offsets = [7, 0, 0], sizes = [1, 16, 16], strides = [1, 1, 1]} : vector<8x16x16xf32> to vector<1x16x16xf32>
    %9 = vector.shape_cast %8 : vector<1x16x16xf32> to vector<16x16xf32>
    %c0_7 = arith.constant 0 : index
    %c0_8 = arith.constant 0 : index
    %10 = vector.load %arg8[%c0_7, %c0_8] : memref<16x16xf32, #tpu.memory_space<vmem>>, vector<16x16xf32>
    tpu.vector_store %arg8[%c0_7, %c0_8], %9 {strides = array<i32>} : memref<16x16xf32, #tpu.memory_space<vmem>>, vector<16x16xf32>,
    %11 = vector.extract_strided_slice %4 {offsets = [1, 0, 0], sizes = [7, 16, 16], strides = [1, 1, 1]} : vector<8x16x16xf32> to vector<7x16x16xf32>
    %12 = vector.extract_strided_slice %4 {offsets = [0, 0, 0], sizes = [7, 16, 16], strides = [1, 1, 1]} : vector<8x16x16xf32> to vector<7x16x16xf32>
    %13 = arith.subf %11, %12 : vector<7x16x16xf32>
    %14 = math.absf %13 : vector<7x16x16xf32>
    %c0_9 = arith.constant 0 : index
    %c0_10 = arith.constant 0 : index
    %15 = vector.load %arg5[%c0_9, %c0_10] : memref<16x16xf32, #tpu.memory_space<vmem>>, vector<16x16xf32>
    %cst = arith.constant dense<0.000000e+00> : vector<16x16xf32>
    %16 = vector.multi_reduction <add>, %14, %cst [0] : vector<7x16x16xf32> to vector<16x16xf32>
    %17 = arith.addf %15, %16 : vector<16x16xf32>
    %c0_11 = arith.constant 0 : index
    %c0_12 = arith.constant 0 : index
    %18 = vector.load %arg5[%c0_11, %c0_12] : memref<16x16xf32, #tpu.memory_space<vmem>>, vector<16x16xf32>
    tpu.vector_store %arg5[%c0_11, %c0_12], %17 {strides = array<i32>} : memref<16x16xf32, #tpu.memory_space<vmem>>, vector<16x16xf32>,
    %19 = vector.extract_strided_slice %4 {offsets = [0, 1, 0], sizes = [8, 15, 16], strides = [1, 1, 1]} : vector<8x16x16xf32> to vector<8x15x16xf32>
    %20 = vector.extract_strided_slice %4 {offsets = [0, 0, 0], sizes = [8, 15, 16], strides = [1, 1, 1]} : vector<8x16x16xf32> to vector<8x15x16xf32>
    %21 = arith.subf %19, %20 : vector<8x15x16xf32>
    %22 = math.absf %21 : vector<8x15x16xf32>
    %c0_13 = arith.constant 0 : index
    %c0_14 = arith.constant 0 : index
    %23 = vector.load %arg6[%c0_13, %c0_14] : memref<15x16xf32, #tpu.memory_space<vmem>>, vector<15x16xf32>
    %cst_15 = arith.constant dense<0.000000e+00> : vector<15x16xf32>
    %24 = vector.multi_reduction <add>, %22, %cst_15 [0] : vector<8x15x16xf32> to vector<15x16xf32>
    %25 = arith.addf %23, %24 : vector<15x16xf32>
    %c0_16 = arith.constant 0 : index
    %c0_17 = arith.constant 0 : index
    %26 = vector.load %arg6[%c0_16, %c0_17] : memref<15x16xf32, #tpu.memory_space<vmem>>, vector<15x16xf32>
    tpu.vector_store %arg6[%c0_16, %c0_17], %25 {strides = array<i32>} : memref<15x16xf32, #tpu.memory_space<vmem>>, vector<15x16xf32>,
    %27 = vector.extract_strided_slice %4 {offsets = [0, 0, 1], sizes = [8, 16, 15], strides = [1, 1, 1]} : vector<8x16x16xf32> to vector<8x16x15xf32>
    %28 = vector.extract_strided_slice %4 {offsets = [0, 0, 0], sizes = [8, 16, 15], strides = [1, 1, 1]} : vector<8x16x16xf32> to vector<8x16x15xf32>
    %29 = arith.subf %27, %28 : vector<8x16x15xf32>
    %30 = math.absf %29 : vector<8x16x15xf32>
    %c0_18 = arith.constant 0 : index
    %c0_19 = arith.constant 0 : index
    %31 = vector.load %arg7[%c0_18, %c0_19] : memref<16x15xf32, #tpu.memory_space<vmem>>, vector<16x15xf32>
    %cst_20 = arith.constant dense<0.000000e+00> : vector<16x15xf32>
    %32 = vector.multi_reduction <add>, %30, %cst_20 [0] : vector<8x16x15xf32> to vector<16x15xf32>
    %33 = arith.addf %31, %32 : vector<16x15xf32>
    %c0_21 = arith.constant 0 : index
    %c0_22 = arith.constant 0 : index
    %34 = vector.load %arg7[%c0_21, %c0_22] : memref<16x15xf32, #tpu.memory_space<vmem>>, vector<16x15xf32>
    tpu.vector_store %arg7[%c0_21, %c0_22], %33 {strides = array<i32>} : memref<16x15xf32, #tpu.memory_space<vmem>>, vector<16x15xf32>,
    %c0_i32_23 = arith.constant 0 : i32
    %35 = arith.cmpi eq, %arg2, %c0_i32_23 : i32
    %36 = arith.extui %35 : i1 to i32
    %c0_i32_24 = arith.constant 0 : i32
    %37 = arith.cmpi ne, %36, %c0_i32_24 : i32
    scf.if %37 {
      %c0_25 = arith.constant 0 : index
      %c0_26 = arith.constant 0 : index
      %38 = vector.load %arg5[%c0_25, %c0_26] : memref<16x16xf32, #tpu.memory_space<vmem>>, vector<16x16xf32>
      %39 = vector.shape_cast %38 : vector<16x16xf32> to vector<1x16x16xf32>
      %cst_27 = arith.constant dense<0.000000e+00> : vector<1xf32>
      %40 = vector.multi_reduction <add>, %39, %cst_27 [1, 2] : vector<1x16x16xf32> to vector<1xf32>
      %41 = vector.shape_cast %40 : vector<1xf32> to vector<1x1x1xf32>
      %42 = vector.extract %41[0, 0, 0] : f32 from vector<1x1x1xf32>
      %c0_28 = arith.constant 0 : index
      %c0_29 = arith.constant 0 : index
      %43 = vector.load %arg6[%c0_28, %c0_29] : memref<15x16xf32, #tpu.memory_space<vmem>>, vector<15x16xf32>
      %44 = vector.shape_cast %43 : vector<15x16xf32> to vector<1x15x16xf32>
      %cst_30 = arith.constant dense<0.000000e+00> : vector<1xf32>
      %45 = vector.multi_reduction <add>, %44, %cst_30 [1, 2] : vector<1x15x16xf32> to vector<1xf32>
      %46 = vector.shape_cast %45 : vector<1xf32> to vector<1x1x1xf32>
      %47 = vector.extract %46[0, 0, 0] : f32 from vector<1x1x1xf32>
      %c0_31 = arith.constant 0 : index
      %c0_32 = arith.constant 0 : index
      %48 = vector.load %arg7[%c0_31, %c0_32] : memref<16x15xf32, #tpu.memory_space<vmem>>, vector<16x15xf32>
      %49 = vector.shape_cast %48 : vector<16x15xf32> to vector<1x16x15xf32>
      %cst_33 = arith.constant dense<0.000000e+00> : vector<1xf32>
      %50 = vector.multi_reduction <add>, %49, %cst_33 [1, 2] : vector<1x16x15xf32> to vector<1xf32>
      %51 = vector.shape_cast %50 : vector<1xf32> to vector<1x1x1xf32>
      %52 = vector.extract %51[0, 0, 0] : f32 from vector<1x1x1xf32>
      %53 = tpu.iota {dimensions = array<i32: 1>} : vector<1x3xi32>
      %c0_i32_34 = arith.constant 0 : i32
      %54 = vector.broadcast %c0_i32_34 : i32 to vector<1x3xi32>
      %55 = arith.cmpi eq, %53, %54 : vector<1x3xi32>
      %c1_i32 = arith.constant 1 : i32
      %56 = vector.broadcast %c1_i32 : i32 to vector<1x3xi32>
      %57 = arith.cmpi eq, %53, %56 : vector<1x3xi32>
      %58 = vector.broadcast %47 : f32 to vector<1x3xf32>
      %59 = vector.broadcast %52 : f32 to vector<1x3xf32>
      %60 = arith.select %57, %58, %59 : vector<1x3xi1>, vector<1x3xf32>
      %61 = vector.broadcast %42 : f32 to vector<1x3xf32>
      %62 = arith.select %55, %61, %60 : vector<1x3xi1>, vector<1x3xf32>
      %c0_35 = arith.constant 0 : index
      %c0_36 = arith.constant 0 : index
      %c0_37 = arith.constant 0 : index
      %c0_38 = arith.constant 0 : index
      %63 = vector.load %arg4[%c0_35, %c0_36, %c0_37, %c0_38] : memref<1x1x1x3xf32, #tpu.memory_space<vmem>>, vector<1x1x1x3xf32>
      %64 = vector.shape_cast %63 : vector<1x1x1x3xf32> to vector<1x3xf32>
      %65 = vector.shape_cast %62 : vector<1x3xf32> to vector<1x1x1x3xf32>
      tpu.vector_store %arg4[%c0_35, %c0_36, %c0_37, %c0_38], %65 {strides = array<i32>} : memref<1x1x1x3xf32, #tpu.memory_space<vmem>>, vector<1x1x1x3xf32>,
    } else {
    }
    return
  }
  func.func @transform_0(%arg0: i32, %arg1: i32, %arg2: i32) -> (i32, i32, i32, i32, i32) {
    %c0_i32 = arith.constant 0 : i32
    %c0_i32_0 = arith.constant 0 : i32
    %c0_i32_1 = arith.constant 0 : i32
    return %arg0, %arg1, %arg2, %c0_i32, %c0_i32_0 : i32, i32, i32, i32, i32
  }
  func.func @transform_1(%arg0: i32, %arg1: i32, %arg2: i32) -> (i32, i32, i32, i32) {
    %c0_i32 = arith.constant 0 : i32
    %c0_i32_0 = arith.constant 0 : i32
    %c0_i32_1 = arith.constant 0 : i32
    return %arg0, %arg1, %c0_i32, %c0_i32_0 : i32, i32, i32, i32
  }
}

</mosaic_0001>

<llo_original>
// kernel: total_variation_l1.1
$region0: #{total_variation_l1.1}
  #allocation0 [shape = 'u32[]', space=smem, size = 0x4, offset = 0x4, fixed_abs, tag = 'smem constant byte address 0x4 - core index']
  #allocation1 [shape = 'u32[144,128]{1,0:T(1,128)}', space=vmem, size = 0x12000, scoped, tag = 'internal scratch']
  #allocation2 [shape = 'f32[16,16]{1,0:T(8,128)}', space=vmem, size = 0x2000, scoped, tag = 'scratch operand']
  #allocation3 [shape = 'f32[15,16]{1,0:T(8,128)}', space=vmem, size = 0x2000, scoped, tag = 'scratch operand']
  #allocation4 [shape = 'f32[16,15]{1,0:T(8,128)}', space=vmem, size = 0x2000, scoped, tag = 'scratch operand']
  #allocation5 [shape = 'f32[16,16]{1,0:T(8,128)}', space=vmem, size = 0x2000, scoped, tag = 'scratch operand']
  %s0 = inlined_call_operand.hbm [shape: f32[2,4,8,16,16], index: 0, kind: input, shape index: {}]
  %s1 = inlined_call_operand.vmem [shape: f32[2,4,1,3], index: 1, kind: output, shape index: {}]
  %s2 = sld [smem:[#allocation0]]
  $region53: #{total_variation_l1.1} parent=0
    _
  %s4 = ssub.s32 1, %s2
  %s5 = scalar_select 0, %s4, %s2
  $region1: #{total_variation_l1.1} parent=0
    #allocation6 [shape = 'u8[131072]{0}', space=vmem, size = 0x20000, scoped, tag = 'input window, operand 0']
    #allocation7 [shape = 's32[2]{0}', space=sflag, size = 0x8, scoped, tag = 'scoped memory for total_variation_l1.1']
    %6 = vsyncpa [#allocation7], 0
    %s7 = scalar_lea.sflag [#allocation7], 1
    %8 = vsyncpa %s7, 0
    loop: start=0, step=1, limit=10
    $region2: #{total_variation_l1.1} parent=1 // loop_pre_header
      _
    $region3: #{total_variation_l1.1} parent=1 // loop_header
      %s10 = sphi 0, %s14
      %p11 = scmp.ge.s32.totalorder %s10, 10
      %s17 = sphi 0, %s36
      %s18 = sphi 0, %s32
      %s19 = sphi 0, %s28
      %s20 = sphi 0, %s17
      %s21 = sphi 0, %s18
      %s22 = sphi 0, %s19
      %s23 = sphi 0, %s20
      %s24 = sphi 0, %s21
      %s25 = sphi 0, %s22
      %s43 = sphi 0, %s45
      %s46 = sphi 0, %s43
      %s47 = sphi 0, %s46
      %s63 = sphi 0, %s47
      %s71 = sphi 0, %s73
      %s74 = sphi 0, %s71
      %s75 = sphi 0, %s74
      %s91 = sphi 0, %s75
    $region4: #{total_variation_l1.1} parent=1 // loop_header_branch
      %13 = sbr.rel (%p11) target = $region8
    $region5: #{total_variation_l1.1} parent=1 // loop_body
      %s15 = ssub.s32 %s10, 1
      %s16 = ssub.s32 %s10, 2
      %s26 = sadd.s32 1, %s19
      %p27 = scmp.ge.s32.totalorder %s26, 1
      %s28 = scalar_select %p27, 0, %s26
      %s29 = sadd.s32 1, %s18
      %s30 = scalar_select %p27, %s29, %s18
      %p31 = scmp.ge.s32.totalorder %s30, 4
      %s32 = scalar_select %p31, 0, %s30
      %s33 = sadd.s32 1, %s17
      %s34 = scalar_select %p31, %s33, %s17
      %p35 = scmp.ge.s32.totalorder %s34, 2
      %s36 = scalar_select %p35, 0, %s34
      %s37 = ssub.s32 %s17, %s36
      %s38 = ssub.s32 %s18, %s32
      %s39 = sor.u32 %s37, %s38
      %s40 = ssub.s32 %s19, %s28
      %s41 = sor.u32 %s39, %s40
      %p42 = scmp.eq.s32.totalorder %s41, 0
      %s44 = sadd.s32 %s43, 1
      %s45 = scalar_select %p42, %s43, %s44
      %p48 = pneg %p42
      %p49 = scmp.eq.s32.totalorder %s10, 7
      %p50 = por %p48, %p49
      %p51 = scmp.ne.s32.totalorder %s43, %s46
      %p52 = scmp.eq.s32.totalorder %s10, 0
      %p53 = por %p51, %p52
      %p54 = scmp.ne.s32.totalorder %s43, %s46
      %p55 = scmp.eq.s32.totalorder %s15, 7
      %p56 = por %p54, %p55
      %p57 = scmp.ne.s32.totalorder %s46, %s47
      %p58 = scmp.eq.s32.totalorder %s15, 0
      %p59 = por %p57, %p58
      %p60 = scmp.ne.s32.totalorder %s46, %s47
      %p61 = scmp.eq.s32.totalorder %s16, 7
      %p62 = por %p60, %p61
      %p64 = scmp.ne.s32.totalorder %s47, %s63
      %p65 = scmp.eq.s32.totalorder %s16, 0
      %p66 = por %p64, %p65
      %s67 = ssub.s32 %s17, %s36
      %s68 = ssub.s32 %s18, %s32
      %s69 = sor.u32 %s67, %s68
      %p70 = scmp.eq.s32.totalorder %s69, 0
      %s72 = sadd.s32 %s71, 1
      %s73 = scalar_select %p70, %s71, %s72
      %p76 = pneg %p70
      %p77 = scmp.eq.s32.totalorder %s10, 7
      %p78 = por %p76, %p77
      %p79 = scmp.ne.s32.totalorder %s71, %s74
      %p80 = scmp.eq.s32.totalorder %s10, 0
      %p81 = por %p79, %p80
      %p82 = scmp.ne.s32.totalorder %s71, %s74
      %p83 = scmp.eq.s32.totalorder %s15, 7
      %p84 = por %p82, %p83
      %p85 = scmp.ne.s32.totalorder %s74, %s75
      %p86 = scmp.eq.s32.totalorder %s15, 0
      %p87 = por %p85, %p86
      %p88 = scmp.ne.s32.totalorder %s74, %s75
      %p89 = scmp.eq.s32.totalorder %s16, 7
      %p90 = por %p88, %p89
      %p92 = scmp.ne.s32.totalorder %s75, %s91
      %p93 = scmp.eq.s32.totalorder %s16, 0
      %p94 = por %p92, %p93
      %p95 = scmp.le.s32.totalorder 1, %s10
      %p96 = scmp.lt.s32.totalorder %s10, 9
      %p97 = pnand %p95, %p96
      %p98 = pneg %p97
      // Predicated region
      $region9: #{total_variation_l1.1} parent=5 // pred_check
        _
      $region10: #{total_variation_l1.1} parent=5 // pred_check_branch
        %100 = sbr.rel (%p97) target = $region12
      $region11: #{total_variation_l1.1} parent=5 // pred_region
        %s101 = ssub.s32 %s10, 1
      $region12: #{total_variation_l1.1} parent=5 // pred_fallthru
        _
      %p102 = scmp.lt.s32.totalorder %s10, 8
      // Predicated region
      $region13: #{total_variation_l1.1} parent=5 // pred_check
        %p103 = pneg %p102
      $region14: #{total_variation_l1.1} parent=5 // pred_check_branch
        %105 = sbr.rel (%p103) target = $region16
      $region15: #{total_variation_l1.1} parent=5 // pred_region
        // Predicated region
        $region17: #{total_variation_l1.1} parent=15 // pred_check
          %p106 = pneg %p53
        $region18: #{total_variation_l1.1} parent=15 // pred_check_branch
          %108 = sbr.rel (%p106) target = $region20
        $region19: #{total_variation_l1.1} parent=15 // pred_region
          %s109 = sand.u32 %s43, 1
          %s110 = scalar_lea.sflag [#allocation7], %s109
          %s111 = sand.u32 %s43, 1
          %s112 = smul.addr %s111, 128
          %s113 = scalar_lea.vmem [#allocation6], %s112
          %s114 = smul.u32 8, %s19
          %s116 = ssub.s32 2048, 2048
          %117 = vsyncadd %s110, %s116
          %s118 = smul.addr %s114, 2
          %s119 = smul.addr %s18, 16
          %s120 = sadd.s32 %s118, %s119
          %s121 = smul.addr %s17, 64
          %s122 = sadd.s32 %s120, %s121
          %s123 = smul.addr %s122, 128
          %s124 = scalar_lea.hbm %s0, %s123
          %s125 = sshll.u32 %s113, 4
          %s126 = int_to_ptr.vmem [resolvable:$true] %s125
          %131 = dma.hbm_to_vmem [thread:$0]  %s124, 2048, %s126, %s110, 128, 128, 8
        $region20: #{total_variation_l1.1} parent=15 // pred_fallthru
          _
      $region16: #{total_variation_l1.1} parent=5 // pred_fallthru
        _
      %p132 = scmp.le.s32.totalorder 1, %s10
      %p133 = scmp.lt.s32.totalorder %s10, 9
      %p134 = pnand %p132, %p133
      %p135 = pneg %p134
      // Predicated region
      $region21: #{total_variation_l1.1} parent=5 // pred_check
        _
      $region22: #{total_variation_l1.1} parent=5 // pred_check_branch
        %137 = sbr.rel (%p134) target = $region24
      $region23: #{total_variation_l1.1} parent=5 // pred_region
        %s138 = ssub.s32 %s10, 1
        %s139 = sand.u32 %s46, 1
        %s140 = scalar_lea.sflag [#allocation7], %s139
        %s141 = sand.u32 %s46, 1
        %s142 = smul.addr %s141, 128
        %s143 = scalar_lea.vmem [#allocation6], %s142
        // Predicated region
        $region25: #{total_variation_l1.1} parent=23 // pred_check
          %p144 = pneg %p59
        $region26: #{total_variation_l1.1} parent=23 // pred_check_branch
          %146 = sbr.rel (%p144) target = $region28
        $region27: #{total_variation_l1.1} parent=23 // pred_region
          %147 = dma.done %s140, 2048
        $region28: #{total_variation_l1.1} parent=23 // pred_fallthru
          _
        %s148 = sand.u32 %s46, 1
        %s149 = scalar_lea.sflag [#allocation7], %s148
        %s150 = sand.u32 %s46, 1
        %s151 = smul.addr %s150, 128
        %s152 = scalar_lea.vmem [#allocation6], %s151
        %p153 = pneg %p59
        %p154 = pneg %p56
        %p155 = pneg %p87
        %p156 = pneg %p84
        %p157 = scmp.lt.s32.totalorder %s20, 1
        %s158 = scalar_select %p157, %s20, 1
        %p159 = scmp.lt.s32.totalorder %s21, 3
        %s160 = scalar_select %p159, %s21, 3
        %s161 = smul.addr %s158, 4
        %s162 = sadd.s32 %s160, %s161
        %s163 = scalar_lea.vmem %s1, %s162
        %s164 = smul.u32 8, %s22
        %p165 = scmp.lt.s32.totalorder %s20, 1
        %s166 = scalar_select %p165, %s20, 1
        %p167 = scmp.lt.s32.totalorder %s21, 3
        %s168 = scalar_select %p167, %s21, 3
        %s169 = smul.addr %s166, 4
        %s170 = sadd.s32 %s168, %s169
        %s171 = scalar_lea.vmem %s1, %s170
        %p172 = scmp.eq.s32.totalorder %s22, 0
        // Predicated region
        $region29: #{total_variation_l1.1} parent=23 // pred_check
          %p173 = pneg %p172
        $region30: #{total_variation_l1.1} parent=23 // pred_check_branch
          %175 = sbr.rel (%p173) target = $region32
        $region31: #{total_variation_l1.1} parent=23 // pred_region
          %vm176 = vcmask 130048
          %177 = vst.msk [vmem:[#allocation2] sm:$0xff] %vm176, 0.0
          %178 = vst.msk [vmem:[#allocation2 + $0x8] sm:$0xff] %vm176, 0.0
          %179 = vst.msk [vmem:[#allocation3] sm:$0xff] %vm176, 0.0
          %vm180 = vcmask 129024
          %181 = vst.msk [vmem:[#allocation3 + $0x8] sm:$0x7f] %vm180, 0.0
          %vm182 = vcmask 121856
          %183 = vst.msk [vmem:[#allocation4] sm:$0xff] %vm182, 0.0
          %184 = vst.msk [vmem:[#allocation4 + $0x8] sm:$0xff] %vm182, 0.0
        $region32: #{total_variation_l1.1} parent=23 // pred_fallthru
          _
        %v185 = vld [vmem:[%s143] sm:$0xff]
        %v186 = vld [vmem:[%s143 + $0x8] sm:$0xff]
        %v187 = vld [vmem:[%s143 + $0x10] sm:$0xff]
        %v188 = vld [vmem:[%s143 + $0x18] sm:$0xff]
        %v189 = vld [vmem:[%s143 + $0x20] sm:$0xff]
        %v190 = vld [vmem:[%s143 + $0x28] sm:$0xff]
        %v191 = vld [vmem:[%s143 + $0x30] sm:$0xff]
        %v192 = vld [vmem:[%s143 + $0x38] sm:$0xff]
        %v193 = vld [vmem:[%s143 + $0x40] sm:$0xff]
        %v194 = vld [vmem:[%s143 + $0x48] sm:$0xff]
        %v195 = vld [vmem:[%s143 + $0x50] sm:$0xff]
        %v196 = vld [vmem:[%s143 + $0x58] sm:$0xff]
        %v197 = vld [vmem:[%s143 + $0x60] sm:$0xff]
        %v198 = vld [vmem:[%s143 + $0x68] sm:$0xff]
        %v199 = vld [vmem:[%s143 + $0x70] sm:$0xff]
        %v200 = vld [vmem:[%s143 + $0x78] sm:$0xff]
        %p201 = scmp.gt.s32.totalorder %s22, 0
        // Predicated region
        $region33: #{total_variation_l1.1} parent=23 // pred_check
          %p202 = pneg %p201
        $region34: #{total_variation_l1.1} parent=23 // pred_check_branch
          %204 = sbr.rel (%p202) target = $region36
        $region35: #{total_variation_l1.1} parent=23 // pred_region
          %v205 = vld [vmem:[#allocation2] sm:$0xff]
          %v206 = vld [vmem:[#allocation2 + $0x8] sm:$0xff]
          %v207 = vld [vmem:[#allocation5] sm:$0xff]
          %v208 = vld [vmem:[#allocation5 + $0x8] sm:$0xff]
          %v209 = vsub.f32 %v185, %v207
          %v210 = vsub.f32 %v186, %v208
          %v211 = vand.u32 2147483647, %v209
          %v212 = vand.u32 2147483647, %v210
          %v213 = vadd.f32 %v205, %v211
          %v214 = vadd.f32 %v206, %v212
          %vm215 = vcmask 130048
          %216 = vst.msk [vmem:[#allocation2] sm:$0xff] %vm215, %v213
          %217 = vst.msk [vmem:[#allocation2 + $0x8] sm:$0xff] %vm215, %v214
        $region36: #{total_variation_l1.1} parent=23 // pred_fallthru
          _
        %vm218 = vcmask 130048
        %219 = vst.msk [vmem:[#allocation5] sm:$0xff] %vm218, %v199
        %220 = vst.msk [vmem:[#allocation5 + $0x8] sm:$0xff] %vm218, %v200
        %v221 = vsub.f32 %v187, %v185
        %v222 = vsub.f32 %v188, %v186
        %v223 = vsub.f32 %v189, %v187
        %v224 = vsub.f32 %v190, %v188
        %v225 = vsub.f32 %v191, %v189
        %v226 = vsub.f32 %v192, %v190
        %v227 = vsub.f32 %v193, %v191
        %v228 = vsub.f32 %v194, %v192
        %v229 = vsub.f32 %v195, %v193
        %v230 = vsub.f32 %v196, %v194
        %v231 = vsub.f32 %v197, %v195
        %v232 = vsub.f32 %v198, %v196
        %v233 = vsub.f32 %v199, %v197
        %v234 = vsub.f32 %v200, %v198
        %v235 = vand.u32 2147483647, %v221
        %v236 = vand.u32 2147483647, %v222
        %v237 = vand.u32 2147483647, %v223
        %v238 = vand.u32 2147483647, %v224
        %v239 = vand.u32 2147483647, %v225
        %v240 = vand.u32 2147483647, %v226
        %v241 = vand.u32 2147483647, %v227
        %v242 = vand.u32 2147483647, %v228
        %v243 = vand.u32 2147483647, %v229
        %v244 = vand.u32 2147483647, %v230
        %v245 = vand.u32 2147483647, %v231
        %v246 = vand.u32 2147483647, %v232
        %v247 = vand.u32 2147483647, %v233
        %v248 = vand.u32 2147483647, %v234
        %v249 = vld [vmem:[#allocation2] sm:$0xff]
        %v250 = vld [vmem:[#allocation2 + $0x8] sm:$0xff]
        %v251 = vsel %vm218, %v235, 0.0
        %v252 = vsel %vm218, %v237, 0.0
        %v253 = vadd.f32 %v251, %v252
        %v254 = vsel %vm218, %v239, 0.0
        %v255 = vadd.f32 %v253, %v254
        %v256 = vsel %vm218, %v241, 0.0
        %v257 = vadd.f32 %v255, %v256
        %v258 = vsel %vm218, %v243, 0.0
        %v259 = vadd.f32 %v257, %v258
        %v260 = vsel %vm218, %v245, 0.0
        %v261 = vadd.f32 %v259, %v260
        %v262 = vsel %vm218, %v247, 0.0
        %v263 = vadd.f32 %v261, %v262
        %v264 = vsel %vm218, %v236, 0.0
        %v265 = vsel %vm218, %v238, 0.0
        %v266 = vadd.f32 %v264, %v265
        %v267 = vsel %vm218, %v240, 0.0
        %v268 = vadd.f32 %v266, %v267
        %v269 = vsel %vm218, %v242, 0.0
        %v270 = vadd.f32 %v268, %v269
        %v271 = vsel %vm218, %v244, 0.0
        %v272 = vadd.f32 %v270, %v271
        %v273 = vsel %vm218, %v246, 0.0
        %v274 = vadd.f32 %v272, %v273
        %v275 = vsel %vm218, %v248, 0.0
        %v276 = vadd.f32 %v274, %v275
        %v277 = vadd.f32 %v249, %v263
        %v278 = vadd.f32 %v250, %v276
        %279 = vst.msk [vmem:[#allocation2] sm:$0xff] %vm218, %v277
        %280 = vst.msk [vmem:[#allocation2 + $0x8] sm:$0xff] %vm218, %v278
        %vm297 = vcmask 1040384
        %v298 = vrot.slane %v185, 7
        %v299 = vrot.slane %v186, 7
        %v300 = vsel %vm297, %v298, %v299
        %v301 = vrot.slane %v187, 7
        %v302 = vrot.slane %v188, 7
        %v303 = vsel %vm297, %v301, %v302
        %v304 = vrot.slane %v189, 7
        %v305 = vrot.slane %v190, 7
        %v306 = vsel %vm297, %v304, %v305
        %v307 = vrot.slane %v191, 7
        %v308 = vrot.slane %v192, 7
        %v309 = vsel %vm297, %v307, %v308
        %v310 = vrot.slane %v193, 7
        %v311 = vrot.slane %v194, 7
        %v312 = vsel %vm297, %v310, %v311
        %v313 = vrot.slane %v195, 7
        %v314 = vrot.slane %v196, 7
        %v315 = vsel %vm297, %v313, %v314
        %v316 = vrot.slane %v197, 7
        %v317 = vrot.slane %v198, 7
        %v318 = vsel %vm297, %v316, %v317
        %v319 = vrot.slane %v199, 7
        %v320 = vrot.slane %v200, 7
        %v321 = vsel %vm297, %v319, %v320
        %v338 = vsub.f32 %v185, %v298
        %v339 = vsub.f32 %v186, %v300
        %v340 = vsub.f32 %v187, %v301
        %v341 = vsub.f32 %v188, %v303
        %v342 = vsub.f32 %v189, %v304
        %v343 = vsub.f32 %v190, %v306
        %v344 = vsub.f32 %v191, %v307
        %v345 = vsub.f32 %v192, %v309
        %v346 = vsub.f32 %v193, %v310
        %v347 = vsub.f32 %v194, %v312
        %v348 = vsub.f32 %v195, %v313
        %v349 = vsub.f32 %v196, %v315
        %v350 = vsub.f32 %v197, %v316
        %v351 = vsub.f32 %v198, %v318
        %v352 = vsub.f32 %v199, %v319
        %v353 = vsub.f32 %v200, %v321
        %v354 = vand.u32 2147483647, %v338
        %v355 = vand.u32 2147483647, %v339
        %v356 = vand.u32 2147483647, %v340
        %v357 = vand.u32 2147483647, %v341
        %v358 = vand.u32 2147483647, %v342
        %v359 = vand.u32 2147483647, %v343
        %v360 = vand.u32 2147483647, %v344
        %v361 = vand.u32 2147483647, %v345
        %v362 = vand.u32 2147483647, %v346
        %v363 = vand.u32 2147483647, %v347
        %v364 = vand.u32 2147483647, %v348
        %v365 = vand.u32 2147483647, %v349
        %v366 = vand.u32 2147483647, %v350
        %v367 = vand.u32 2147483647, %v351
        %v368 = vand.u32 2147483647, %v352
        %v369 = vand.u32 2147483647, %v353
        %v370 = vld [vmem:[#allocation3] sm:$0xff]
        %v371 = vld [vmem:[#allocation3 + $0x8] sm:$0x7f]
        %vm372 = vcmask 130049
        %v373 = vsel %vm372, %v354, 0.0
        %v374 = vsel %vm372, %v356, 0.0
        %v375 = vadd.f32 %v373, %v374
        %v376 = vsel %vm372, %v358, 0.0
        %v377 = vadd.f32 %v375, %v376
        %v378 = vsel %vm372, %v360, 0.0
        %v379 = vadd.f32 %v377, %v378
        %v380 = vsel %vm372, %v362, 0.0
        %v381 = vadd.f32 %v379, %v380
        %v382 = vsel %vm372, %v364, 0.0
        %v383 = vadd.f32 %v381, %v382
        %v384 = vsel %vm372, %v366, 0.0
        %v385 = vadd.f32 %v383, %v384
        %v386 = vsel %vm372, %v368, 0.0
        %v387 = vadd.f32 %v385, %v386
        %v388 = vsel %vm218, %v355, 0.0
        %v389 = vsel %vm218, %v357, 0.0
        %v390 = vadd.f32 %v388, %v389
        %v391 = vsel %vm218, %v359, 0.0
        %v392 = vadd.f32 %v390, %v391
        %v393 = vsel %vm218, %v361, 0.0
        %v394 = vadd.f32 %v392, %v393
        %v395 = vsel %vm218, %v363, 0.0
        %v396 = vadd.f32 %v394, %v395
        %v397 = vsel %vm218, %v365, 0.0
        %v398 = vadd.f32 %v396, %v397
        %v399 = vsel %vm218, %v367, 0.0
        %v400 = vadd.f32 %v398, %v399
        %v401 = vsel %vm218, %v369, 0.0
        %v402 = vadd.f32 %v400, %v401
        %vm405 = vcmask 1046528
        %v406 = vrot.slane %v387, 1
        %v407 = vrot.slane %v402, 1
        %v408 = vsel %vm405, %v406, %v407
        %v411 = vadd.f32 %v370, %v408
        %v412 = vadd.f32 %v371, %v407
        %413 = vst.msk [vmem:[#allocation3] sm:$0xff] %vm218, %v411
        %vm414 = vcmask 129024
        %415 = vst.msk [vmem:[#allocation3 + $0x8] sm:$0x7f] %vm414, %v412
        %416 = vrot.lane.b32.xlu0 %v185, 1
        %v417 = vpop.permute.xlu0 %416
        %418 = vrot.lane.b32.xlu0 %v186, 1
        %v419 = vpop.permute.xlu0 %418
        %420 = vrot.lane.b32.xlu0 %v187, 1
        %v421 = vpop.permute.xlu0 %420
        %422 = vrot.lane.b32.xlu0 %v188, 1
        %v423 = vpop.permute.xlu0 %422
        %424 = vrot.lane.b32.xlu0 %v189, 1
        %v425 = vpop.permute.xlu0 %424
        %426 = vrot.lane.b32.xlu0 %v190, 1
        %v427 = vpop.permute.xlu0 %426
        %428 = vrot.lane.b32.xlu0 %v191, 1
        %v429 = vpop.permute.xlu0 %428
        %430 = vrot.lane.b32.xlu0 %v192, 1
        %v431 = vpop.permute.xlu0 %430
        %432 = vrot.lane.b32.xlu0 %v193, 1
        %v433 = vpop.permute.xlu0 %432
        %434 = vrot.lane.b32.xlu0 %v194, 1
        %v435 = vpop.permute.xlu0 %434
        %436 = vrot.lane.b32.xlu0 %v195, 1
        %v437 = vpop.permute.xlu0 %436
        %438 = vrot.lane.b32.xlu0 %v196, 1
        %v439 = vpop.permute.xlu0 %438
        %440 = vrot.lane.b32.xlu0 %v197, 1
        %v441 = vpop.permute.xlu0 %440
        %442 = vrot.lane.b32.xlu0 %v198, 1
        %v443 = vpop.permute.xlu0 %442
        %444 = vrot.lane.b32.xlu0 %v199, 1
        %v445 = vpop.permute.xlu0 %444
        %446 = vrot.lane.b32.xlu0 %v200, 1
        %v447 = vpop.permute.xlu0 %446
        %v464 = vsub.f32 %v185, %v417
        %v465 = vsub.f32 %v186, %v419
        %v466 = vsub.f32 %v187, %v421
        %v467 = vsub.f32 %v188, %v423
        %v468 = vsub.f32 %v189, %v425
        %v469 = vsub.f32 %v190, %v427
        %v470 = vsub.f32 %v191, %v429
        %v471 = vsub.f32 %v192, %v431
        %v472 = vsub.f32 %v193, %v433
        %v473 = vsub.f32 %v194, %v435
        %v474 = vsub.f32 %v195, %v437
        %v475 = vsub.f32 %v196, %v439
        %v476 = vsub.f32 %v197, %v441
        %v477 = vsub.f32 %v198, %v443
        %v478 = vsub.f32 %v199, %v445
        %v479 = vsub.f32 %v200, %v447
        %v480 = vand.u32 2147483647, %v464
        %v481 = vand.u32 2147483647, %v465
        %v482 = vand.u32 2147483647, %v466
        %v483 = vand.u32 2147483647, %v467
        %v484 = vand.u32 2147483647, %v468
        %v485 = vand.u32 2147483647, %v469
        %v486 = vand.u32 2147483647, %v470
        %v487 = vand.u32 2147483647, %v471
        %v488 = vand.u32 2147483647, %v472
        %v489 = vand.u32 2147483647, %v473
        %v490 = vand.u32 2147483647, %v474
        %v491 = vand.u32 2147483647, %v475
        %v492 = vand.u32 2147483647, %v476
        %v493 = vand.u32 2147483647, %v477
        %v494 = vand.u32 2147483647, %v478
        %v495 = vand.u32 2147483647, %v479
        %v496 = vld [vmem:[#allocation4] sm:$0xff]
        %v497 = vld [vmem:[#allocation4 + $0x8] sm:$0xff]
        %vm498 = vcmask 130056
        %v499 = vsel %vm498, %v480, 0.0
        %v500 = vsel %vm498, %v482, 0.0
        %v501 = vadd.f32 %v499, %v500
        %v502 = vsel %vm498, %v484, 0.0
        %v503 = vadd.f32 %v501, %v502
        %v504 = vsel %vm498, %v486, 0.0
        %v505 = vadd.f32 %v503, %v504
        %v506 = vsel %vm498, %v488, 0.0
        %v507 = vadd.f32 %v505, %v506
        %v508 = vsel %vm498, %v490, 0.0
        %v509 = vadd.f32 %v507, %v508
        %v510 = vsel %vm498, %v492, 0.0
        %v511 = vadd.f32 %v509, %v510
        %v512 = vsel %vm498, %v494, 0.0
        %v513 = vadd.f32 %v511, %v512
        %v514 = vsel %vm498, %v481, 0.0
        %v515 = vsel %vm498, %v483, 0.0
        %v516 = vadd.f32 %v514, %v515
        %v517 = vsel %vm498, %v485, 0.0
        %v518 = vadd.f32 %v516, %v517
        %v519 = vsel %vm498, %v487, 0.0
        %v520 = vadd.f32 %v518, %v519
        %v521 = vsel %vm498, %v489, 0.0
        %v522 = vadd.f32 %v520, %v521
        %v523 = vsel %vm498, %v491, 0.0
        %v524 = vadd.f32 %v522, %v523
        %v525 = vsel %vm498, %v493, 0.0
        %v526 = vadd.f32 %v524, %v525
        %v527 = vsel %vm498, %v495, 0.0
        %v528 = vadd.f32 %v526, %v527
        %531 = vrot.lane.b32.xlu0 %v513, 127
        %v532 = vpop.permute.xlu0 %531
        %533 = vrot.lane.b32.xlu0 %v528, 127
        %v534 = vpop.permute.xlu0 %533
        %v537 = vadd.f32 %v496, %v532
        %v538 = vadd.f32 %v497, %v534
        %vm539 = vcmask 121856
        %540 = vst.msk [vmem:[#allocation4] sm:$0xff] %vm539, %v537
        %541 = vst.msk [vmem:[#allocation4 + $0x8] sm:$0xff] %vm539, %v538
        // Predicated region
        $region37: #{total_variation_l1.1} parent=23 // pred_check
          %p542 = pneg %p172
        $region38: #{total_variation_l1.1} parent=23 // pred_check_branch
          %544 = sbr.rel (%p542) target = $region40
        $region39: #{total_variation_l1.1} parent=23 // pred_region
          %v545 = vld [vmem:[#allocation2] sm:$0xff]
          %v546 = vld [vmem:[#allocation2 + $0x8] sm:$0xff]
          %v547 = vsel %vm218, %v545, 0.0
          %v548 = vsel %vm218, %v546, 0.0
          %v549 = vadd.f32 %v547, %v548
          %550 = vadd.xlane.f32.xlu0 %v549
          %v551 = vpop.xlane.xlu0 %550
          %v552 = vrot.slane %v551, 4
          %v553 = vadd.f32 %v551, %v552
          %v554 = vrot.slane %v553, 2
          %v555 = vadd.f32 %v553, %v554
          %v556 = vrot.slane %v555, 1
          %v557 = vadd.f32 %v555, %v556
          %s558 = vtos %v557
          %v559 = vld [vmem:[#allocation3] sm:$0xff]
          %v560 = vld [vmem:[#allocation3 + $0x8] sm:$0x7f]
          %v561 = vsel %vm218, %v559, 0.0
          %v562 = vsel %vm414, %v560, 0.0
          %v563 = vadd.f32 %v561, %v562
          %564 = vadd.xlane.f32.xlu0 %v563
          %v565 = vpop.xlane.xlu0 %564
          %v566 = vrot.slane %v565, 4
          %v567 = vadd.f32 %v565, %v566
          %v568 = vrot.slane %v567, 2
          %v569 = vadd.f32 %v567, %v568
          %v570 = vrot.slane %v569, 1
          %v571 = vadd.f32 %v569, %v570
          %s572 = vtos %v571
          %v573 = vld [vmem:[#allocation4] sm:$0xff]
          %v574 = vld [vmem:[#allocation4 + $0x8] sm:$0xff]
          %v575 = vsel %vm539, %v573, 0.0
          %v576 = vsel %vm539, %v574, 0.0
          %v577 = vadd.f32 %v575, %v576
          %578 = vadd.xlane.f32.xlu0 %v577
          %v579 = vpop.xlane.xlu0 %578
          %v580 = vrot.slane %v579, 4
          %v581 = vadd.f32 %v579, %v580
          %v582 = vrot.slane %v581, 2
          %v583 = vadd.f32 %v581, %v582
          %v584 = vrot.slane %v583, 1
          %v585 = vadd.f32 %v583, %v584
          %s586 = vtos %v585
          %v587 = vlaneseq
          %v588 = vand.u32 %v587, 127
          %vm589 = vcmp.eq.s32.totalorder %v588, 0
          %vm590 = vcmp.eq.s32.totalorder %v588, 1
          %v591 = vstv %s572
          %v592 = vstv %s586
          %v593 = vsel %vm590, %v591, %v592
          %v594 = vstv %s558
          %v595 = vsel %vm589, %v594, %v593
          %vm596 = vcmask 16384
          %597 = vst.msk [vmem:[%s171] sm:$0x1] %vm596, %v595
        $region40: #{total_variation_l1.1} parent=23 // pred_fallthru
          _
        %p598 = scmp.lt.s32.totalorder %s20, 1
        %s599 = scalar_select %p598, %s20, 1
        %p600 = scmp.lt.s32.totalorder %s21, 3
        %s601 = scalar_select %p600, %s21, 3
        %s602 = smul.addr %s599, 4
        %s603 = sadd.s32 %s601, %s602
        %s604 = scalar_lea.vmem %s1, %s603
        // Predicated region
        $region41: #{total_variation_l1.1} parent=23 // pred_check
          %p605 = pneg %p84
        $region42: #{total_variation_l1.1} parent=23 // pred_check_branch
          %607 = sbr.rel (%p605) target = $region44
        $region43: #{total_variation_l1.1} parent=23 // pred_region
          _
        $region44: #{total_variation_l1.1} parent=23 // pred_fallthru
          _
      $region24: #{total_variation_l1.1} parent=5 // pred_fallthru
        _
      %p608 = scmp.le.s32.totalorder 2, %s10
      // Predicated region
      $region45: #{total_variation_l1.1} parent=5 // pred_check
        %p609 = pneg %p608
      $region46: #{total_variation_l1.1} parent=5 // pred_check_branch
        %611 = sbr.rel (%p609) target = $region48
      $region47: #{total_variation_l1.1} parent=5 // pred_region
        %s612 = ssub.s32 %s10, 2
        // Predicated region
        $region49: #{total_variation_l1.1} parent=47 // pred_check
          %p613 = pneg %p90
        $region50: #{total_variation_l1.1} parent=47 // pred_check_branch
          %615 = sbr.rel (%p613) target = $region52
        $region51: #{total_variation_l1.1} parent=47 // pred_region
          %p616 = scmp.lt.s32.totalorder %s23, 1
          %s617 = scalar_select %p616, %s23, 1
          %p618 = scmp.lt.s32.totalorder %s24, 3
          %s619 = scalar_select %p618, %s24, 3
          %s620 = smul.addr %s617, 4
          %s621 = sadd.s32 %s619, %s620
          %s622 = scalar_lea.vmem %s1, %s621
        $region52: #{total_variation_l1.1} parent=47 // pred_fallthru
          _
      $region48: #{total_variation_l1.1} parent=5 // pred_fallthru
        _
    $region6: #{total_variation_l1.1} parent=1 // loop_footer
      %s14 = sadd.s32 1, %s10
    $region7: #{total_variation_l1.1} parent=1 // loop_footer_branch
      %9 = sbr.rel target = $region3
    $region8: #{total_variation_l1.1} parent=1 // loop_exit
      _
    %623 = vsyncpa [#allocation7], 1
    %s624 = scalar_lea.sflag [#allocation7], 1
    %625 = vsyncpa %s624, 1

</llo_original>
